<compile_context>
chip_gen: v6e
topology: v6e:2x2x1
jax: 0.10.0
libtpu: 0.0.40
codegen_flags: <defaults>
</compile_context>

<pallas_src>
import jax
import jax.numpy as jnp
from jax import lax
from jax.experimental import pallas as pl
from jax.experimental.pallas import tpu as pltpu  # noqa: F401  (TPU backend assumed)

D = 16          # physical Hilbert-space dim: Alice (2 qubits) ⊗ Bob (2 qubits)
TD = 2 * D      # block-real ("[[R,-I],[I,R]]") dimension = 32
K = 4           # number of Kraus operators (Alice's measurement outcomes)


# ----------------------------------------------------------------------------
# Fused kernel:  rho_out_blk = sum_k (M_k U)_blk rho_blk (M_k U)_blk^T
# ----------------------------------------------------------------------------
def _locc_kernel(m_ref, u_ref, rho_ref, out_ref):
    m = m_ref[...]        # (K*TD, TD) = (128, 32): B(M_k) stacked along rows
    u = u_ref[...]        # (TD, TD)   = (32, 32):  B(U_A ⊗ U_B)
    rho = rho_ref[...]    # (TD, TD)   = (32, 32):  B(rho_in)

    # E_k = M_k @ U  and  T_k = E_k @ rho  for all k at once (two MXU matmuls).
    e = jnp.dot(m, u, preferred_element_type=jnp.float32)      # (128, 32)
    t = jnp.dot(e, rho, preferred_element_type=jnp.float32)    # (128, 32)

    # rho_out = sum_k T_k @ E_k^T : contract last dims of both operands
    # (A @ B^T fed straight to the MXU, no explicit transpose), unrolled
    # statically over K, accumulate in vregs, single store.
    dn = (((1,), (1,)), ((), ()))
    acc = jnp.zeros((TD, TD), jnp.float32)
    for k in range(K):
        tk = t[k * TD:(k + 1) * TD, :]
        ek = e[k * TD:(k + 1) * TD, :]
        acc = acc + lax.dot_general(tk, ek, dn,
                                    preferred_element_type=jnp.float32)
    out_ref[...] = acc


def _to_block_real(a):
    """complex (..., n, n) -> real block form [[Re, -Im], [Im, Re]]."""
    ar = jnp.real(a).astype(jnp.float32)
    ai = jnp.imag(a).astype(jnp.float32)
    top = jnp.concatenate([ar, -ai], axis=-1)
    bot = jnp.concatenate([ai, ar], axis=-1)
    return jnp.concatenate([top, bot], axis=-2)


@jax.jit
def one_way_locc_forward(rho, U, M):
    """Pallas-backed forward(): rho_out = sum_k (M_k U) rho (M_k U)^dagger."""
    m_rows = _to_block_real(M).reshape(K * TD, TD)   # (128, 32)
    u_blk = _to_block_real(U)                        # (32, 32)
    rho_blk = _to_block_real(rho)                    # (32, 32)

    out_blk = pl.pallas_call(
        _locc_kernel,
        out_shape=jax.ShapeDtypeStruct((TD, TD), jnp.float32),
    )(m_rows, u_blk, rho_blk)

    # B(rho_out) = [[Re, -Im], [Im, Re]]  ->  rho_out
    return (out_blk[:D, :D] + 1j * out_blk[D:, :D]).astype(jnp.complex64)


# ----------------------------------------------------------------------------
# Glue: deterministic "OneWayLOCCNet" setup (Alice: 2 qubits, Bob: 2 qubits)
# ----------------------------------------------------------------------------
def _random_unitary(key, dim):
    kr, ki = jax.random.split(key)
    a = (jax.random.normal(kr, (dim, dim), jnp.float32)
         + 1j * jax.random.normal(ki, (dim, dim), jnp.float32)).astype(jnp.complex64)
    q, r = jnp.linalg.qr(a)
    ph = jnp.diag(r) / jnp.abs(jnp.diag(r))   # fix phases for determinism
    return q * ph[None, :]


def build_locc_problem(key):
    """party_info = {'Alice': 2, 'Bob': 2}; Bell pairs (A0,B0) and (A1,B1);
    Alice measures both qubits in the computational basis, Bob applies a
    bit-flip correction conditioned on the classical outcome."""
    d_party = 4            # 2 qubits per party
    Dim = d_party * d_party  # 16

    # --- initial state: two Bell pairs, reordered to [A0, A1, B0, B1] ---
    bell = jnp.array([1.0, 0.0, 0.0, 1.0], jnp.complex64) / jnp.sqrt(2.0)
    psi = jnp.kron(bell, bell)                        # order [A0, B0, A1, B1]
    psi = psi.reshape(2, 2, 2, 2).transpose(0, 2, 1, 3).reshape(Dim)
    rho = jnp.outer(psi, jnp.conj(psi))               # (16, 16) density matrix

    # --- local circuits (parameterized local unitaries) ---
    ka, kb = jax.random.split(key)
    u_alice = _random_unitary(ka, d_party)
    u_bob = _random_unitary(kb, d_party)
    U = jnp.kron(u_alice, u_bob)                      # (16, 16)

    # --- one-way LOCC Kraus operators: M_k = P_k (x) C_k ---
    eye2 = jnp.eye(2, dtype=jnp.complex64)
    X = jnp.array([[0, 1], [1, 0]], jnp.complex64)
    kraus = []
    for k in range(d_party):
        b0, b1 = (k >> 1) & 1, k & 1
        proj = jnp.zeros((d_party, d_party), jnp.complex64).at[k, k].set(1.0)
        corr = jnp.kron(X if b0 else eye2, X if b1 else eye2)
        kraus.append(jnp.kron(proj, corr))
    M = jnp.stack(kraus, axis=0)                      # (4, 16, 16)
    return rho, U, M


def one_way_locc_reference(rho, U, M):
    E = jnp.einsum('kab,bc->kac', M, U)
    return jnp.einsum('kab,bc,kdc->ad', E, rho, jnp.conj(E))


if __name__ == "__main__":
    key = jax.random.PRNGKey(0)
    rho, U, M = build_locc_problem(key)

    out = one_way_locc_forward(rho, U, M)
    out = jax.block_until_ready(out)

    ref = one_way_locc_reference(rho, U, M)
    assert out.shape == (D, D) and out.dtype == jnp.complex64
    assert jnp.allclose(out, ref, atol=1e-4), "Pallas result mismatch vs reference"
    assert jnp.allclose(jnp.trace(out), 1.0 + 0.0j, atol=1e-4), "channel not trace-preserving"

    print("KERNEL_OK")
</pallas_src>

<mosaic_0001>
module attributes {stable_mosaic.version = 11 : i64} {
  func.func @_locc_kernel(%arg0: memref<128x32xf32, #tpu.memory_space<vmem>>, %arg1: memref<32x32xf32, #tpu.memory_space<vmem>>, %arg2: memref<32x32xf32, #tpu.memory_space<vmem>>, %arg3: memref<32x32xf32, #tpu.memory_space<vmem>>) attributes {dimension_semantics = [], scalar_prefetch = 0 : i64, scratch_operands = 0 : i64, tpu.core_type = #tpu.core_type<tc>} {
    %c0 = arith.constant 0 : index
    %c0_0 = arith.constant 0 : index
    %0 = vector.load %arg0[%c0, %c0_0] : memref<128x32xf32, #tpu.memory_space<vmem>>, vector<128x32xf32>
    %c0_1 = arith.constant 0 : index
    %c0_2 = arith.constant 0 : index
    %1 = vector.load %arg1[%c0_1, %c0_2] : memref<32x32xf32, #tpu.memory_space<vmem>>, vector<32x32xf32>
    %c0_3 = arith.constant 0 : index
    %c0_4 = arith.constant 0 : index
    %2 = vector.load %arg2[%c0_3, %c0_4] : memref<32x32xf32, #tpu.memory_space<vmem>>, vector<32x32xf32>
    %cst = arith.constant dense<0.000000e+00> : vector<128x32xf32>
    %3 = tpu.matmul %0, %1, %cst {dimension_numbers = #tpu.dot_dimension_numbers<[1], [0], [0], [1], [0, 0, 1, 1], [], []>} : vector<128x32xf32>, vector<32x32xf32>, vector<128x32xf32> -> vector<128x32xf32>
    %cst_5 = arith.constant dense<0.000000e+00> : vector<128x32xf32>
    %4 = tpu.matmul %3, %2, %cst_5 {dimension_numbers = #tpu.dot_dimension_numbers<[1], [0], [0], [1], [0, 0, 1, 1], [], []>} : vector<128x32xf32>, vector<32x32xf32>, vector<128x32xf32> -> vector<128x32xf32>
    %cst_6 = arith.constant 0.000000e+00 : f32
    %5 = vector.broadcast %cst_6 : f32 to vector<32x32xf32>
    %6 = vector.extract_strided_slice %4 {offsets = [0, 0], sizes = [32, 32], strides = [1, 1]} : vector<128x32xf32> to vector<32x32xf32>
    %7 = vector.extract_strided_slice %3 {offsets = [0, 0], sizes = [32, 32], strides = [1, 1]} : vector<128x32xf32> to vector<32x32xf32>
    %cst_7 = arith.constant dense<0.000000e+00> : vector<32x32xf32>
    %8 = tpu.matmul %6, %7, %cst_7 {dimension_numbers = #tpu.dot_dimension_numbers<[1], [1], [0], [0], [0, 0, 1, 0], [], []>} : vector<32x32xf32>, vector<32x32xf32>, vector<32x32xf32> -> vector<32x32xf32>
    %9 = arith.addf %5, %8 : vector<32x32xf32>
    %10 = vector.extract_strided_slice %4 {offsets = [32, 0], sizes = [32, 32], strides = [1, 1]} : vector<128x32xf32> to vector<32x32xf32>
    %11 = vector.extract_strided_slice %3 {offsets = [32, 0], sizes = [32, 32], strides = [1, 1]} : vector<128x32xf32> to vector<32x32xf32>
    %cst_8 = arith.constant dense<0.000000e+00> : vector<32x32xf32>
    %12 = tpu.matmul %10, %11, %cst_8 {dimension_numbers = #tpu.dot_dimension_numbers<[1], [1], [0], [0], [0, 0, 1, 0], [], []>} : vector<32x32xf32>, vector<32x32xf32>, vector<32x32xf32> -> vector<32x32xf32>
    %13 = arith.addf %9, %12 : vector<32x32xf32>
    %14 = vector.extract_strided_slice %4 {offsets = [64, 0], sizes = [32, 32], strides = [1, 1]} : vector<128x32xf32> to vector<32x32xf32>
    %15 = vector.extract_strided_slice %3 {offsets = [64, 0], sizes = [32, 32], strides = [1, 1]} : vector<128x32xf32> to vector<32x32xf32>
    %cst_9 = arith.constant dense<0.000000e+00> : vector<32x32xf32>
    %16 = tpu.matmul %14, %15, %cst_9 {dimension_numbers = #tpu.dot_dimension_numbers<[1], [1], [0], [0], [0, 0, 1, 0], [], []>} : vector<32x32xf32>, vector<32x32xf32>, vector<32x32xf32> -> vector<32x32xf32>
    %17 = arith.addf %13, %16 : vector<32x32xf32>
    %18 = vector.extract_strided_slice %4 {offsets = [96, 0], sizes = [32, 32], strides = [1, 1]} : vector<128x32xf32> to vector<32x32xf32>
    %19 = vector.extract_strided_slice %3 {offsets = [96, 0], sizes = [32, 32], strides = [1, 1]} : vector<128x32xf32> to vector<32x32xf32>
    %cst_10 = arith.constant dense<0.000000e+00> : vector<32x32xf32>
    %20 = tpu.matmul %18, %19, %cst_10 {dimension_numbers = #tpu.dot_dimension_numbers<[1], [1], [0], [0], [0, 0, 1, 0], [], []>} : vector<32x32xf32>, vector<32x32xf32>, vector<32x32xf32> -> vector<32x32xf32>
    %21 = arith.addf %17, %20 : vector<32x32xf32>
    %c0_11 = arith.constant 0 : index
    %c0_12 = arith.constant 0 : index
    %22 = vector.load %arg3[%c0_11, %c0_12] : memref<32x32xf32, #tpu.memory_space<vmem>>, vector<32x32xf32>
    tpu.vector_store %arg3[%c0_11, %c0_12], %21 {strides = array<i32>} : memref<32x32xf32, #tpu.memory_space<vmem>>, vector<32x32xf32>,
    return
  }
}

</mosaic_0001>

<llo_original>
// kernel: custom-call
$region0: #{custom-call}
  %s0 = inlined_call_operand.hbm [shape: c64[4,16,16], index: 0, kind: input, shape index: {}]
  %s1 = inlined_call_operand.vmem [shape: f32[4,16,16], index: 1, kind: output, shape index: {}]
  $region1: #{custom-call} parent=0
    #allocation0 [shape = 's32[1]{0}', space=sflag, size = 0x4, scoped, tag = 'scoped memory for custom-call']
    %2 = vsyncpa [#allocation0], 0
    %s3 = sshll.u32 %s1, 4
    %s4 = int_to_ptr.vmem [resolvable:$true] %s3
    %6 = dma.hbm_to_vmem [thread:$0]  %s0, 1024, %s4, [#allocation0]
    %7 = dma.done [#allocation0], 1024
    %8 = vsyncpa [#allocation0], 1

// kernel: custom-call.1
$region0: #{custom-call.1}
  %s0 = inlined_call_operand.hbm [shape: c64[4,16,16], index: 0, kind: input, shape index: {}]
  %s1 = inlined_call_operand.vmem [shape: f32[4,16,16], index: 1, kind: output, shape index: {}]
  %s2 = scalar_lea.hbm %s0, 1024
  $region1: #{custom-call.1} parent=0
    #allocation0 [shape = 's32[1]{0}', space=sflag, size = 0x4, scoped, tag = 'scoped memory for custom-call.1']
    %3 = vsyncpa [#allocation0], 0
    %s4 = sshll.u32 %s1, 4
    %s5 = int_to_ptr.vmem [resolvable:$true] %s4
    %7 = dma.hbm_to_vmem [thread:$0]  %s2, 1024, %s5, [#allocation0]
    %8 = dma.done [#allocation0], 1024
    %9 = vsyncpa [#allocation0], 1

// kernel: neg.3
$region0: #{neg.3}
  #allocation0 [shape = 's32[1]{0}', space=sflag, size = 0x4, scoped, tag = 'scoped memory for neg.3']
  %s0 = inlined_call_operand.vmem [shape: f32[4,16,16], index: 0, kind: input, shape index: {}]
  %s1 = inlined_call_operand.vmem [shape: f32[4,16,16], index: 1, kind: output, shape index: {}]
  %v2 = vld [vmem:[%s0] sm:$0xff]
  %3 = xla_tuple %v2
  %4 = xla_tuple %3
  %v5 = vxor.u32 %v2, 2147483648
  %6 = xla_tuple %v5
  %7 = vst [vmem:[%s1] sm:$0xff] %v5
  %s8 = scalar_lea.vmem %s0, 16
  %v9 = vld [vmem:[%s8] sm:$0xff]
  %10 = xla_tuple %v9
  %11 = xla_tuple %10
  %v12 = vxor.u32 %v9, 2147483648
  %13 = xla_tuple %v12
  %s14 = scalar_lea.vmem %s1, 16
  %15 = vst [vmem:[%s14] sm:$0xff] %v12
  %s16 = scalar_lea.vmem %s0, 32
  %v17 = vld [vmem:[%s16] sm:$0xff]
  %18 = xla_tuple %v17
  %19 = xla_tuple %18
  %v20 = vxor.u32 %v17, 2147483648
  %21 = xla_tuple %v20
  %s22 = scalar_lea.vmem %s1, 32
  %23 = vst [vmem:[%s22] sm:$0xff] %v20
  %s24 = scalar_lea.vmem %s0, 48
  %v25 = vld [vmem:[%s24] sm:$0xff]
  %26 = xla_tuple %v25
  %27 = xla_tuple %26
  %v28 = vxor.u32 %v25, 2147483648
  %29 = xla_tuple %v28
  %s30 = scalar_lea.vmem %s1, 48
  %31 = vst [vmem:[%s30] sm:$0xff] %v28
  %s32 = scalar_lea.vmem %s0, 8
  %v33 = vld [vmem:[%s32] sm:$0xff]
  %34 = xla_tuple %v33
  %35 = xla_tuple %34
  %v36 = vxor.u32 %v33, 2147483648
  %37 = xla_tuple %v36
  %s38 = scalar_lea.vmem %s1, 8
  %39 = vst [vmem:[%s38] sm:$0xff] %v36
  %s40 = scalar_lea.vmem %s0, 24
  %v41 = vld [vmem:[%s40] sm:$0xff]
  %42 = xla_tuple %v41
  %43 = xla_tuple %42
  %v44 = vxor.u32 %v41, 2147483648
  %45 = xla_tuple %v44
  %s46 = scalar_lea.vmem %s1, 24
  %47 = vst [vmem:[%s46] sm:$0xff] %v44
  %s48 = scalar_lea.vmem %s0, 40
  %v49 = vld [vmem:[%s48] sm:$0xff]
  %50 = xla_tuple %v49
  %51 = xla_tuple %50
  %v52 = vxor.u32 %v49, 2147483648
  %53 = xla_tuple %v52
  %s54 = scalar_lea.vmem %s1, 40
  %55 = vst [vmem:[%s54] sm:$0xff] %v52
  %s56 = scalar_lea.vmem %s0, 56
  %v57 = vld [vmem:[%s56] sm:$0xff]
  %58 = xla_tuple %v57
  %59 = xla_tuple %58
  %v60 = vxor.u32 %v57, 2147483648
  %61 = xla_tuple %v60
  %s62 = scalar_lea.vmem %s1, 56
  %63 = vst [vmem:[%s62] sm:$0xff] %v60

// kernel: custom-call.2
$region0: #{custom-call.2}
  %s0 = inlined_call_operand.hbm [shape: c64[16,16], index: 0, kind: input, shape index: {}]
  %s1 = inlined_call_operand.vmem [shape: f32[16,16], index: 1, kind: output, shape index: {}]
  $region1: #{custom-call.2} parent=0
    #allocation0 [shape = 's32[1]{0}', space=sflag, size = 0x4, scoped, tag = 'scoped memory for custom-call.2']
    %2 = vsyncpa [#allocation0], 0
    %s3 = sshll.u32 %s1, 4
    %s4 = int_to_ptr.vmem [resolvable:$true] %s3
    %6 = dma.hbm_to_vmem [thread:$0]  %s0, 256, %s4, [#allocation0]
    %7 = dma.done [#allocation0], 256
    %8 = vsyncpa [#allocation0], 1

// kernel: neg.4
$region0: #{neg.4}
  #allocation0 [shape = 's32[1]{0}', space=sflag, size = 0x4, scoped, tag = 'scoped memory for neg.4']
  %s0 = inlined_call_operand.vmem [shape: f32[16,16], index: 0, kind: input, shape index: {}]
  %s1 = inlined_call_operand.vmem [shape: f32[16,16], index: 1, kind: output, shape index: {}]
  %v2 = vld [vmem:[%s0] sm:$0xff]
  %3 = xla_tuple %v2
  %4 = xla_tuple %3
  %v5 = vxor.u32 %v2, 2147483648
  %6 = xla_tuple %v5
  %7 = vst [vmem:[%s1] sm:$0xff] %v5
  %s8 = scalar_lea.vmem %s0, 8
  %v9 = vld [vmem:[%s8] sm:$0xff]
  %10 = xla_tuple %v9
  %11 = xla_tuple %10
  %v12 = vxor.u32 %v9, 2147483648
  %13 = xla_tuple %v12
  %s14 = scalar_lea.vmem %s1, 8
  %15 = vst [vmem:[%s14] sm:$0xff] %v12

// kernel: custom-call.3
$region0: #{custom-call.3}
  %s0 = inlined_call_operand.hbm [shape: c64[16,16], index: 0, kind: input, shape index: {}]
  %s1 = inlined_call_operand.vmem [shape: f32[16,16], index: 1, kind: output, shape index: {}]
  %s2 = scalar_lea.hbm %s0, 256
  $region1: #{custom-call.3} parent=0
    #allocation0 [shape = 's32[1]{0}', space=sflag, size = 0x4, scoped, tag = 'scoped memory for custom-call.3']
    %3 = vsyncpa [#allocation0], 0
    %s4 = sshll.u32 %s1, 4
    %s5 = int_to_ptr.vmem [resolvable:$true] %s4
    %7 = dma.hbm_to_vmem [thread:$0]  %s2, 256, %s5, [#allocation0]
    %8 = dma.done [#allocation0], 256
    %9 = vsyncpa [#allocation0], 1

// kernel: custom-call.6
$region0: #{custom-call.6}
  %s0 = inlined_call_operand.vmem [shape: f32[16,16], index: 0, kind: input, shape index: {}]
  %s1 = inlined_call_operand.vmem [shape: f32[16,16], index: 1, kind: input, shape index: {}]
  %s2 = inlined_call_operand.hbm [shape: c64[16,16], index: 2, kind: output, shape index: {}]
  %s3 = scalar_lea.hbm %s2, 256
  $region1: #{custom-call.6} parent=0
    #allocation0 [shape = 's32[1]{0}', space=sflag, size = 0x4, scoped, tag = 'scoped memory for custom-call.6']
    %4 = vsyncpa [#allocation0], 0
    %s5 = sshll.u32 %s0, 4
    %s6 = int_to_ptr.vmem [resolvable:$true] %s5
    %8 = dma.vmem_to_hbm [thread:$0]  %s6, 256, %s2, [#allocation0]
    %9 = dma.done [#allocation0], 256
    %10 = vsyncpa [#allocation0], 1
  $region2: #{custom-call.6} parent=0
    #allocation1 [shape = 's32[1]{0}', space=sflag, size = 0x4, scoped, tag = 'scoped memory for custom-call.6']
    %11 = vsyncpa [#allocation1], 0
    %s12 = sshll.u32 %s1, 4
    %s13 = int_to_ptr.vmem [resolvable:$true] %s12
    %15 = dma.vmem_to_hbm [thread:$0]  %s13, 256, %s3, [#allocation1]
    %16 = dma.done [#allocation1], 256
    %17 = vsyncpa [#allocation1], 1

// kernel: one_way_locc_forward.1
$region0: #{one_way_locc_forward.1}
  #allocation0 [shape = 'u32[]', space=smem, size = 0x4, offset = 0x4, fixed_abs, tag = 'smem constant byte address 0x4 - core index']
  #allocation1 [shape = 'u32[144,128]{1,0:T(1,128)}', space=vmem, size = 0x12000, scoped, tag = 'internal scratch']
  %s0 = inlined_call_operand.vmem [shape: f32[128,32], index: 0, kind: input, shape index: {}]
  %s1 = inlined_call_operand.vmem [shape: f32[32,32], index: 1, kind: input, shape index: {}]
  %s2 = inlined_call_operand.vmem [shape: f32[32,32], index: 2, kind: input, shape index: {}]
  %s3 = inlined_call_operand.vmem [shape: f32[32,32], index: 3, kind: output, shape index: {}]
  %s4 = sld [smem:[#allocation0]]
  $region22: #{one_way_locc_forward.1} parent=0
    _
  %s6 = ssub.s32 1, %s4
  %s7 = scalar_select 0, %s6, %s4
  // Predicated region
  $region2: #{one_way_locc_forward.1} parent=0 // pred_check
    _
  $region3: #{one_way_locc_forward.1} parent=0 // pred_check_branch
    %9 = sbr.rel (0) target = $region5
  $region4: #{one_way_locc_forward.1} parent=0 // pred_region
    _
  $region5: #{one_way_locc_forward.1} parent=0 // pred_fallthru
    _
  // Predicated region
  $region6: #{one_way_locc_forward.1} parent=0 // pred_check
    _
  $region7: #{one_way_locc_forward.1} parent=0 // pred_check_branch
    %11 = sbr.rel (0) target = $region9
  $region8: #{one_way_locc_forward.1} parent=0 // pred_region
    _
  $region9: #{one_way_locc_forward.1} parent=0 // pred_fallthru
    _
  // Predicated region
  $region10: #{one_way_locc_forward.1} parent=0 // pred_check
    _
  $region11: #{one_way_locc_forward.1} parent=0 // pred_check_branch
    %13 = sbr.rel (0) target = $region13
  $region12: #{one_way_locc_forward.1} parent=0 // pred_region
    _
  $region13: #{one_way_locc_forward.1} parent=0 // pred_fallthru
    _
  %v14 = vld [vmem:[%s0] sm:$0xff]
  %v15 = vld [vmem:[%s0 + $0x8] sm:$0xff]
  %v16 = vld [vmem:[%s0 + $0x10] sm:$0xff]
  %v17 = vld [vmem:[%s0 + $0x18] sm:$0xff]
  %v18 = vld [vmem:[%s0 + $0x20] sm:$0xff]
  %v19 = vld [vmem:[%s0 + $0x28] sm:$0xff]
  %v20 = vld [vmem:[%s0 + $0x30] sm:$0xff]
  %v21 = vld [vmem:[%s0 + $0x38] sm:$0xff]
  %v22 = vld [vmem:[%s0 + $0x40] sm:$0xff]
  %v23 = vld [vmem:[%s0 + $0x48] sm:$0xff]
  %v24 = vld [vmem:[%s0 + $0x50] sm:$0xff]
  %v25 = vld [vmem:[%s0 + $0x58] sm:$0xff]
  %v26 = vld [vmem:[%s0 + $0x60] sm:$0xff]
  %v27 = vld [vmem:[%s0 + $0x68] sm:$0xff]
  %v28 = vld [vmem:[%s0 + $0x70] sm:$0xff]
  %v29 = vld [vmem:[%s0 + $0x78] sm:$0xff]
  %v30 = vld [vmem:[%s1] sm:$0xff]
  %v31 = vld [vmem:[%s1 + $0x8] sm:$0xff]
  %v32 = vld [vmem:[%s1 + $0x10] sm:$0xff]
  %v33 = vld [vmem:[%s1 + $0x18] sm:$0xff]
  %v34 = vld [vmem:[%s2] sm:$0xff]
  %v35 = vld [vmem:[%s2 + $0x8] sm:$0xff]
  %v36 = vld [vmem:[%s2 + $0x10] sm:$0xff]
  %v37 = vld [vmem:[%s2 + $0x18] sm:$0xff]
  %vm38 = vcmask 261120
  %v40 = vsel %vm38, %v14, 0
  %v43 = vsel %vm38, %v15, 0
  %v46 = vsel %vm38, %v16, 0
  %v49 = vsel %vm38, %v17, 0
  %v52 = vsel %vm38, %v18, 0
  %v55 = vsel %vm38, %v19, 0
  %v58 = vsel %vm38, %v20, 0
  %v61 = vsel %vm38, %v21, 0
  %v64 = vsel %vm38, %v22, 0
  %v67 = vsel %vm38, %v23, 0
  %v70 = vsel %vm38, %v24, 0
  %v73 = vsel %vm38, %v25, 0
  %v76 = vsel %vm38, %v26, 0
  %v79 = vsel %vm38, %v27, 0
  %v82 = vsel %vm38, %v28, 0
  %v85 = vsel %vm38, %v29, 0
  %87 = vmatprep.subr.mxu0 0.0
  %88 = vmatpush1.msra.mxu0 0.0
  %89 = vmatprep.subr.mxu0 0.0
  %90 = vmatpush1.msra.mxu0 0.0
  %91 = vmatprep.subr.mxu0 0.0
  %92 = vmatpush1.msra.mxu0 0.0
  %93 = vmatprep.subr.mxu0 0.0
  %94 = vmatpush1.msra.mxu0 0.0
  %95 = vmatprep.subr.mxu0 0.0
  %96 = vmatpush1.msra.mxu0 0.0
  %97 = vmatprep.subr.mxu0 0.0
  %98 = vmatpush1.msra.mxu0 0.0
  %99 = vmatprep.subr.mxu0 0.0
  %100 = vmatpush1.msra.mxu0 0.0
  %101 = vmatprep.subr.mxu0 0.0
  %102 = vmatpush1.msra.mxu0 0.0
  %103 = vmatprep.subr.mxu0 0.0
  %104 = vmatpush1.msra.mxu0 0.0
  %105 = vmatprep.subr.mxu0 0.0
  %106 = vmatpush1.msra.mxu0 0.0
  %107 = vmatprep.subr.mxu0 0.0
  %108 = vmatpush1.msra.mxu0 0.0
  %109 = vmatprep.subr.mxu0 0.0
  %110 = vmatpush1.msra.mxu0 0.0
  %111 = vmatprep.subr.mxu0 0.0
  %112 = vmatpush1.msra.mxu0 %v33
  %113 = vmatprep.subr.mxu0 0.0
  %114 = vmatpush1.msra.mxu0 %v32
  %115 = vmatprep.subr.mxu0 0.0
  %116 = vmatpush1.msra.mxu0 %v31
  %117 = vmatprep.subr.mxu0 0.0
  %118 = vmatpush1.msra.mxu0 %v30
  %119 = vmatprep.subr.mxu0 0.0
  %120 = vmatpush2.msra.mxu0 0.0
  %121 = vmatprep.subr.mxu0 0.0
  %122 = vmatpush2.msra.mxu0 0.0
  %123 = vmatprep.subr.mxu0 0.0
  %124 = vmatpush2.msra.mxu0 0.0
  %125 = vmatprep.subr.mxu0 0.0
  %126 = vmatpush2.msra.mxu0 0.0
  %127 = vmatprep.subr.mxu0 0.0
  %128 = vmatpush2.msra.mxu0 0.0
  %129 = vmatprep.subr.mxu0 0.0
  %130 = vmatpush2.msra.mxu0 0.0
  %131 = vmatprep.subr.mxu0 0.0
  %132 = vmatpush2.msra.mxu0 0.0
  %133 = vmatprep.subr.mxu0 0.0
  %134 = vmatpush2.msra.mxu0 0.0
  %135 = vmatprep.subr.mxu0 0.0
  %136 = vmatpush2.msra.mxu0 0.0
  %137 = vmatprep.subr.mxu0 0.0
  %138 = vmatpush2.msra.mxu0 0.0
  %139 = vmatprep.subr.mxu0 0.0
  %140 = vmatpush2.msra.mxu0 0.0
  %141 = vmatprep.subr.mxu0 0.0
  %142 = vmatpush2.msra.mxu0 0.0
  %143 = vmatprep.subr.mxu0 0.0
  %144 = vmatpush2.msra.mxu0 0.0
  %145 = vmatprep.subr.mxu0 0.0
  %146 = vmatpush2.msra.mxu0 0.0
  %147 = vmatprep.subr.mxu0 0.0
  %148 = vmatpush2.msra.mxu0 0.0
  %149 = vmatprep.subr.mxu0 0.0
  %150 = vmatpush2.msra.mxu0 0.0
  %151 = vmatprep.mubr.f32.mxu0 0.0
  %152 = vmatmul.mubr.f32.gmra.mxu0 %v40
  %v153 = vpop.f32.mrf.mxu0
  %v154 = vadd.f32 0.0, %v153
  %v155 = vpop.f32.mrf.mxu0
  %156 = vmatprep.mubr.f32.mxu0 0.0
  %157 = vmatmul.mubr.f32.gmra.mxu0 %v43
  %v158 = vpop.f32.mrf.mxu0
  %v159 = vadd.f32 0.0, %v158
  %v160 = vpop.f32.mrf.mxu0
  %161 = vmatprep.mubr.f32.mxu0 0.0
  %162 = vmatmul.mubr.f32.gmra.mxu0 %v46
  %v163 = vpop.f32.mrf.mxu0
  %v164 = vadd.f32 0.0, %v163
  %v165 = vpop.f32.mrf.mxu0
  %166 = vmatprep.mubr.f32.mxu0 0.0
  %167 = vmatmul.mubr.f32.gmra.mxu0 %v49
  %v168 = vpop.f32.mrf.mxu0
  %v169 = vadd.f32 0.0, %v168
  %v170 = vpop.f32.mrf.mxu0
  %171 = vmatprep.mubr.f32.mxu0 0.0
  %172 = vmatmul.mubr.f32.gmra.mxu0 %v52
  %v173 = vpop.f32.mrf.mxu0
  %v174 = vadd.f32 0.0, %v173
  %v175 = vpop.f32.mrf.mxu0
  %176 = vmatprep.mubr.f32.mxu0 0.0
  %177 = vmatmul.mubr.f32.gmra.mxu0 %v55
  %v178 = vpop.f32.mrf.mxu0
  %v179 = vadd.f32 0.0, %v178
  %v180 = vpop.f32.mrf.mxu0
  %181 = vmatprep.mubr.f32.mxu0 0.0
  %182 = vmatmul.mubr.f32.gmra.mxu0 %v58
  %v183 = vpop.f32.mrf.mxu0
  %v184 = vadd.f32 0.0, %v183
  %v185 = vpop.f32.mrf.mxu0
  %186 = vmatprep.mubr.f32.mxu0 0.0
  %187 = vmatmul.mubr.f32.gmra.mxu0 %v61
  %v188 = vpop.f32.mrf.mxu0
  %v189 = vadd.f32 0.0, %v188
  %v190 = vpop.f32.mrf.mxu0
  %191 = vmatprep.mubr.f32.mxu0 0.0
  %192 = vmatmul.mubr.f32.gmra.mxu0 %v64
  %v193 = vpop.f32.mrf.mxu0
  %v194 = vadd.f32 0.0, %v193
  %v195 = vpop.f32.mrf.mxu0
  %196 = vmatprep.mubr.f32.mxu0 0.0
  %197 = vmatmul.mubr.f32.gmra.mxu0 %v67
  %v198 = vpop.f32.mrf.mxu0
  %v199 = vadd.f32 0.0, %v198
  %v200 = vpop.f32.mrf.mxu0
  %201 = vmatprep.mubr.f32.mxu0 0.0
  %202 = vmatmul.mubr.f32.gmra.mxu0 %v70
  %v203 = vpop.f32.mrf.mxu0
  %v204 = vadd.f32 0.0, %v203
  %v205 = vpop.f32.mrf.mxu0
  %206 = vmatprep.mubr.f32.mxu0 0.0
  %207 = vmatmul.mubr.f32.gmra.mxu0 %v73
  %v208 = vpop.f32.mrf.mxu0
  %v209 = vadd.f32 0.0, %v208
  %v210 = vpop.f32.mrf.mxu0
  %211 = vmatprep.mubr.f32.mxu0 0.0
  %212 = vmatmul.mubr.f32.gmra.mxu0 %v76
  %v213 = vpop.f32.mrf.mxu0
  %v214 = vadd.f32 0.0, %v213
  %v215 = vpop.f32.mrf.mxu0
  %216 = vmatprep.mubr.f32.mxu0 0.0
  %217 = vmatmul.mubr.f32.gmra.mxu0 %v79
  %v218 = vpop.f32.mrf.mxu0
  %v219 = vadd.f32 0.0, %v218
  %v220 = vpop.f32.mrf.mxu0
  %221 = vmatprep.mubr.f32.mxu0 0.0
  %222 = vmatmul.mubr.f32.gmra.mxu0 %v82
  %v223 = vpop.f32.mrf.mxu0
  %v224 = vadd.f32 0.0, %v223
  %v225 = vpop.f32.mrf.mxu0
  %226 = vmatprep.mubr.f32.mxu0 0.0
  %227 = vmatmul.mubr.f32.gmra.mxu0 %v85
  %v228 = vpop.f32.mrf.mxu0
  %v229 = vadd.f32 0.0, %v228
  %v230 = vpop.f32.mrf.mxu0
  %231 = vdwg.mxu0
  %v233 = vsel %vm38, %v154, 0
  %v236 = vsel %vm38, %v159, 0
  %v239 = vsel %vm38, %v164, 0
  %v242 = vsel %vm38, %v169, 0
  %v245 = vsel %vm38, %v174, 0
  %v248 = vsel %vm38, %v179, 0
  %v251 = vsel %vm38, %v184, 0
  %v254 = vsel %vm38, %v189, 0
  %v257 = vsel %vm38, %v194, 0
  %v260 = vsel %vm38, %v199, 0
  %v263 = vsel %vm38, %v204, 0
  %v266 = vsel %vm38, %v209, 0
  %v269 = vsel %vm38, %v214, 0
  %v272 = vsel %vm38, %v219, 0
  %v275 = vsel %vm38, %v224, 0
  %v278 = vsel %vm38, %v229, 0
  %280 = vmatprep.subr.mxu0 0.0
  %281 = vmatpush1.msra.mxu0 0.0
  %282 = vmatprep.subr.mxu0 0.0
  %283 = vmatpush1.msra.mxu0 0.0
  %284 = vmatprep.subr.mxu0 0.0
  %285 = vmatpush1.msra.mxu0 0.0
  %286 = vmatprep.subr.mxu0 0.0
  %287 = vmatpush1.msra.mxu0 0.0
  %288 = vmatprep.subr.mxu0 0.0
  %289 = vmatpush1.msra.mxu0 0.0
  %290 = vmatprep.subr.mxu0 0.0
  %291 = vmatpush1.msra.mxu0 0.0
  %292 = vmatprep.subr.mxu0 0.0
  %293 = vmatpush1.msra.mxu0 0.0
  %294 = vmatprep.subr.mxu0 0.0
  %295 = vmatpush1.msra.mxu0 0.0
  %296 = vmatprep.subr.mxu0 0.0
  %297 = vmatpush1.msra.mxu0 0.0
  %298 = vmatprep.subr.mxu0 0.0
  %299 = vmatpush1.msra.mxu0 0.0
  %300 = vmatprep.subr.mxu0 0.0
  %301 = vmatpush1.msra.mxu0 0.0
  %302 = vmatprep.subr.mxu0 0.0
  %303 = vmatpush1.msra.mxu0 0.0
  %304 = vmatprep.subr.mxu0 0.0
  %305 = vmatpush1.msra.mxu0 %v37
  %306 = vmatprep.subr.mxu0 0.0
  %307 = vmatpush1.msra.mxu0 %v36
  %308 = vmatprep.subr.mxu0 0.0
  %309 = vmatpush1.msra.mxu0 %v35
  %310 = vmatprep.subr.mxu0 0.0
  %311 = vmatpush1.msra.mxu0 %v34
  %312 = vmatprep.subr.mxu0 0.0
  %313 = vmatpush2.msra.mxu0 0.0
  %314 = vmatprep.subr.mxu0 0.0
  %315 = vmatpush2.msra.mxu0 0.0
  %316 = vmatprep.subr.mxu0 0.0
  %317 = vmatpush2.msra.mxu0 0.0
  %318 = vmatprep.subr.mxu0 0.0
  %319 = vmatpush2.msra.mxu0 0.0
  %320 = vmatprep.subr.mxu0 0.0
  %321 = vmatpush2.msra.mxu0 0.0
  %322 = vmatprep.subr.mxu0 0.0
  %323 = vmatpush2.msra.mxu0 0.0
  %324 = vmatprep.subr.mxu0 0.0
  %325 = vmatpush2.msra.mxu0 0.0
  %326 = vmatprep.subr.mxu0 0.0
  %327 = vmatpush2.msra.mxu0 0.0
  %328 = vmatprep.subr.mxu0 0.0
  %329 = vmatpush2.msra.mxu0 0.0
  %330 = vmatprep.subr.mxu0 0.0
  %331 = vmatpush2.msra.mxu0 0.0
  %332 = vmatprep.subr.mxu0 0.0
  %333 = vmatpush2.msra.mxu0 0.0
  %334 = vmatprep.subr.mxu0 0.0
  %335 = vmatpush2.msra.mxu0 0.0
  %336 = vmatprep.subr.mxu0 0.0
  %337 = vmatpush2.msra.mxu0 0.0
  %338 = vmatprep.subr.mxu0 0.0
  %339 = vmatpush2.msra.mxu0 0.0
  %340 = vmatprep.subr.mxu0 0.0
  %341 = vmatpush2.msra.mxu0 0.0
  %342 = vmatprep.subr.mxu0 0.0
  %343 = vmatpush2.msra.mxu0 0.0
  %344 = vmatprep.mubr.f32.mxu0 0.0
  %345 = vmatmul.mubr.f32.gmra.mxu0 %v233
  %v346 = vpop.f32.mrf.mxu0
  %v347 = vadd.f32 0.0, %v346
  %v348 = vpop.f32.mrf.mxu0
  %349 = vmatprep.mubr.f32.mxu0 0.0
  %350 = vmatmul.mubr.f32.gmra.mxu0 %v236
  %v351 = vpop.f32.mrf.mxu0
  %v352 = vadd.f32 0.0, %v351
  %v353 = vpop.f32.mrf.mxu0
  %354 = vmatprep.mubr.f32.mxu0 0.0
  %355 = vmatmul.mubr.f32.gmra.mxu0 %v239
  %v356 = vpop.f32.mrf.mxu0
  %v357 = vadd.f32 0.0, %v356
  %v358 = vpop.f32.mrf.mxu0
  %359 = vmatprep.mubr.f32.mxu0 0.0
  %360 = vmatmul.mubr.f32.gmra.mxu0 %v242
  %v361 = vpop.f32.mrf.mxu0
  %v362 = vadd.f32 0.0, %v361
  %v363 = vpop.f32.mrf.mxu0
  %364 = vmatprep.mubr.f32.mxu0 0.0
  %365 = vmatmul.mubr.f32.gmra.mxu0 %v245
  %v366 = vpop.f32.mrf.mxu0
  %v367 = vadd.f32 0.0, %v366
  %v368 = vpop.f32.mrf.mxu0
  %369 = vmatprep.mubr.f32.mxu0 0.0
  %370 = vmatmul.mubr.f32.gmra.mxu0 %v248
  %v371 = vpop.f32.mrf.mxu0
  %v372 = vadd.f32 0.0, %v371
  %v373 = vpop.f32.mrf.mxu0
  %374 = vmatprep.mubr.f32.mxu0 0.0
  %375 = vmatmul.mubr.f32.gmra.mxu0 %v251
  %v376 = vpop.f32.mrf.mxu0
  %v377 = vadd.f32 0.0, %v376
  %v378 = vpop.f32.mrf.mxu0
  %379 = vmatprep.mubr.f32.mxu0 0.0
  %380 = vmatmul.mubr.f32.gmra.mxu0 %v254
  %v381 = vpop.f32.mrf.mxu0
  %v382 = vadd.f32 0.0, %v381
  %v383 = vpop.f32.mrf.mxu0
  %384 = vmatprep.mubr.f32.mxu0 0.0
  %385 = vmatmul.mubr.f32.gmra.mxu0 %v257
  %v386 = vpop.f32.mrf.mxu0
  %v387 = vadd.f32 0.0, %v386
  %v388 = vpop.f32.mrf.mxu0
  %389 = vmatprep.mubr.f32.mxu0 0.0
  %390 = vmatmul.mubr.f32.gmra.mxu0 %v260
  %v391 = vpop.f32.mrf.mxu0
  %v392 = vadd.f32 0.0, %v391
  %v393 = vpop.f32.mrf.mxu0
  %394 = vmatprep.mubr.f32.mxu0 0.0
  %395 = vmatmul.mubr.f32.gmra.mxu0 %v263
  %v396 = vpop.f32.mrf.mxu0
  %v397 = vadd.f32 0.0, %v396
  %v398 = vpop.f32.mrf.mxu0
  %399 = vmatprep.mubr.f32.mxu0 0.0
  %400 = vmatmul.mubr.f32.gmra.mxu0 %v266
  %v401 = vpop.f32.mrf.mxu0
  %v402 = vadd.f32 0.0, %v401
  %v403 = vpop.f32.mrf.mxu0
  %404 = vmatprep.mubr.f32.mxu0 0.0
  %405 = vmatmul.mubr.f32.gmra.mxu0 %v269
  %v406 = vpop.f32.mrf.mxu0
  %v407 = vadd.f32 0.0, %v406
  %v408 = vpop.f32.mrf.mxu0
  %409 = vmatprep.mubr.f32.mxu0 0.0
  %410 = vmatmul.mubr.f32.gmra.mxu0 %v272
  %v411 = vpop.f32.mrf.mxu0
  %v412 = vadd.f32 0.0, %v411
  %v413 = vpop.f32.mrf.mxu0
  %414 = vmatprep.mubr.f32.mxu0 0.0
  %415 = vmatmul.mubr.f32.gmra.mxu0 %v275
  %v416 = vpop.f32.mrf.mxu0
  %v417 = vadd.f32 0.0, %v416
  %v418 = vpop.f32.mrf.mxu0
  %419 = vmatprep.mubr.f32.mxu0 0.0
  %420 = vmatmul.mubr.f32.gmra.mxu0 %v278
  %v421 = vpop.f32.mrf.mxu0
  %v422 = vadd.f32 0.0, %v421
  %v423 = vpop.f32.mrf.mxu0
  %424 = vdwg.mxu0
  %v426 = vsel %vm38, %v367, 0
  %v429 = vsel %vm38, %v372, 0
  %v432 = vsel %vm38, %v377, 0
  %v435 = vsel %vm38, %v382, 0
  %437 = vmatprep.subr.mxu0 0.0
  %438 = vmatpush1.xpose.msra.mxu0 0.0
  %439 = vmatprep.subr.mxu0 0.0
  %440 = vmatpush1.xpose.msra.mxu0 0.0
  %441 = vmatprep.subr.mxu0 0.0
  %442 = vmatpush1.xpose.msra.mxu0 0.0
  %443 = vmatprep.subr.mxu0 0.0
  %444 = vmatpush1.xpose.msra.mxu0 0.0
  %445 = vmatprep.subr.mxu0 0.0
  %446 = vmatpush1.xpose.msra.mxu0 0.0
  %447 = vmatprep.subr.mxu0 0.0
  %448 = vmatpush1.xpose.msra.mxu0 0.0
  %449 = vmatprep.subr.mxu0 0.0
  %450 = vmatpush1.xpose.msra.mxu0 0.0
  %451 = vmatprep.subr.mxu0 0.0
  %452 = vmatpush1.xpose.msra.mxu0 0.0
  %453 = vmatprep.subr.mxu0 0.0
  %454 = vmatpush1.xpose.msra.mxu0 0.0
  %455 = vmatprep.subr.mxu0 0.0
  %456 = vmatpush1.xpose.msra.mxu0 0.0
  %457 = vmatprep.subr.mxu0 0.0
  %458 = vmatpush1.xpose.msra.mxu0 0.0
  %459 = vmatprep.subr.mxu0 0.0
  %460 = vmatpush1.xpose.msra.mxu0 0.0
  %461 = vmatprep.subr.mxu0 0.0
  %462 = vmatpush1.xpose.msra.mxu0 %v254
  %463 = vmatprep.subr.mxu0 0.0
  %464 = vmatpush1.xpose.msra.mxu0 %v251
  %465 = vmatprep.subr.mxu0 0.0
  %466 = vmatpush1.xpose.msra.mxu0 %v248
  %467 = vmatprep.subr.mxu0 0.0
  %468 = vmatpush1.xpose.msra.mxu0 %v245
  %469 = vmatprep.subr.mxu0 0.0
  %470 = vmatpush2.xpose.msra.mxu0 0.0
  %471 = vmatprep.subr.mxu0 0.0
  %472 = vmatpush2.xpose.msra.mxu0 0.0
  %473 = vmatprep.subr.mxu0 0.0
  %474 = vmatpush2.xpose.msra.mxu0 0.0
  %475 = vmatprep.subr.mxu0 0.0
  %476 = vmatpush2.xpose.msra.mxu0 0.0
  %477 = vmatprep.subr.mxu0 0.0
  %478 = vmatpush2.xpose.msra.mxu0 0.0
  %479 = vmatprep.subr.mxu0 0.0
  %480 = vmatpush2.xpose.msra.mxu0 0.0
  %481 = vmatprep.subr.mxu0 0.0
  %482 = vmatpush2.xpose.msra.mxu0 0.0
  %483 = vmatprep.subr.mxu0 0.0
  %484 = vmatpush2.xpose.msra.mxu0 0.0
  %485 = vmatprep.subr.mxu0 0.0
  %486 = vmatpush2.xpose.msra.mxu0 0.0
  %487 = vmatprep.subr.mxu0 0.0
  %488 = vmatpush2.xpose.msra.mxu0 0.0
  %489 = vmatprep.subr.mxu0 0.0
  %490 = vmatpush2.xpose.msra.mxu0 0.0
  %491 = vmatprep.subr.mxu0 0.0
  %492 = vmatpush2.xpose.msra.mxu0 0.0
  %493 = vmatprep.subr.mxu0 0.0
  %494 = vmatpush2.xpose.msra.mxu0 0.0
  %495 = vmatprep.subr.mxu0 0.0
  %496 = vmatpush2.xpose.msra.mxu0 0.0
  %497 = vmatprep.subr.mxu0 0.0
  %498 = vmatpush2.xpose.msra.mxu0 0.0
  %499 = vmatprep.subr.mxu0 0.0
  %500 = vmatpush2.xpose.msra.mxu0 0.0
  %501 = vmatprep.mubr.f32.mxu0 0.0
  %502 = vmatmul.mubr.f32.gmra.mxu0 %v426
  %v503 = vpop.f32.mrf.mxu0
  %v504 = vadd.f32 0.0, %v503
  %v505 = vpop.f32.mrf.mxu0
  %506 = vmatprep.mubr.f32.mxu0 0.0
  %507 = vmatmul.mubr.f32.gmra.mxu0 %v429
  %v508 = vpop.f32.mrf.mxu0
  %v509 = vadd.f32 0.0, %v508
  %v510 = vpop.f32.mrf.mxu0
  %511 = vmatprep.mubr.f32.mxu0 0.0
  %512 = vmatmul.mubr.f32.gmra.mxu0 %v432
  %v513 = vpop.f32.mrf.mxu0
  %v514 = vadd.f32 0.0, %v513
  %v515 = vpop.f32.mrf.mxu0
  %516 = vmatprep.mubr.f32.mxu0 0.0
  %517 = vmatmul.mubr.f32.gmra.mxu0 %v435
  %v518 = vpop.f32.mrf.mxu0
  %v519 = vadd.f32 0.0, %v518
  %v520 = vpop.f32.mrf.mxu0
  %521 = vdwg.mxu0
  %v523 = vsel %vm38, %v347, 0
  %v526 = vsel %vm38, %v352, 0
  %v529 = vsel %vm38, %v357, 0
  %v532 = vsel %vm38, %v362, 0
  %534 = vmatprep.subr.mxu0 0.0
  %535 = vmatpush1.xpose.msra.mxu0 0.0
  %536 = vmatprep.subr.mxu0 0.0
  %537 = vmatpush1.xpose.msra.mxu0 0.0
  %538 = vmatprep.subr.mxu0 0.0
  %539 = vmatpush1.xpose.msra.mxu0 0.0
  %540 = vmatprep.subr.mxu0 0.0
  %541 = vmatpush1.xpose.msra.mxu0 0.0
  %542 = vmatprep.subr.mxu0 0.0
  %543 = vmatpush1.xpose.msra.mxu0 0.0
  %544 = vmatprep.subr.mxu0 0.0
  %545 = vmatpush1.xpose.msra.mxu0 0.0
  %546 = vmatprep.subr.mxu0 0.0
  %547 = vmatpush1.xpose.msra.mxu0 0.0
  %548 = vmatprep.subr.mxu0 0.0
  %549 = vmatpush1.xpose.msra.mxu0 0.0
  %550 = vmatprep.subr.mxu0 0.0
  %551 = vmatpush1.xpose.msra.mxu0 0.0
  %552 = vmatprep.subr.mxu0 0.0
  %553 = vmatpush1.xpose.msra.mxu0 0.0
  %554 = vmatprep.subr.mxu0 0.0
  %555 = vmatpush1.xpose.msra.mxu0 0.0
  %556 = vmatprep.subr.mxu0 0.0
  %557 = vmatpush1.xpose.msra.mxu0 0.0
  %558 = vmatprep.subr.mxu0 0.0
  %559 = vmatpush1.xpose.msra.mxu0 %v242
  %560 = vmatprep.subr.mxu0 0.0
  %561 = vmatpush1.xpose.msra.mxu0 %v239
  %562 = vmatprep.subr.mxu0 0.0
  %563 = vmatpush1.xpose.msra.mxu0 %v236
  %564 = vmatprep.subr.mxu0 0.0
  %565 = vmatpush1.xpose.msra.mxu0 %v233
  %566 = vmatprep.subr.mxu0 0.0
  %567 = vmatpush2.xpose.msra.mxu0 0.0
  %568 = vmatprep.subr.mxu0 0.0
  %569 = vmatpush2.xpose.msra.mxu0 0.0
  %570 = vmatprep.subr.mxu0 0.0
  %571 = vmatpush2.xpose.msra.mxu0 0.0
  %572 = vmatprep.subr.mxu0 0.0
  %573 = vmatpush2.xpose.msra.mxu0 0.0
  %574 = vmatprep.subr.mxu0 0.0
  %575 = vmatpush2.xpose.msra.mxu0 0.0
  %576 = vmatprep.subr.mxu0 0.0
  %577 = vmatpush2.xpose.msra.mxu0 0.0
  %578 = vmatprep.subr.mxu0 0.0
  %579 = vmatpush2.xpose.msra.mxu0 0.0
  %580 = vmatprep.subr.mxu0 0.0
  %581 = vmatpush2.xpose.msra.mxu0 0.0
  %582 = vmatprep.subr.mxu0 0.0
  %583 = vmatpush2.xpose.msra.mxu0 0.0
  %584 = vmatprep.subr.mxu0 0.0
  %585 = vmatpush2.xpose.msra.mxu0 0.0
  %586 = vmatprep.subr.mxu0 0.0
  %587 = vmatpush2.xpose.msra.mxu0 0.0
  %588 = vmatprep.subr.mxu0 0.0
  %589 = vmatpush2.xpose.msra.mxu0 0.0
  %590 = vmatprep.subr.mxu0 0.0
  %591 = vmatpush2.xpose.msra.mxu0 0.0
  %592 = vmatprep.subr.mxu0 0.0
  %593 = vmatpush2.xpose.msra.mxu0 0.0
  %594 = vmatprep.subr.mxu0 0.0
  %595 = vmatpush2.xpose.msra.mxu0 0.0
  %596 = vmatprep.subr.mxu0 0.0
  %597 = vmatpush2.xpose.msra.mxu0 0.0
  %598 = vmatprep.mubr.f32.mxu0 0.0
  %599 = vmatmul.mubr.f32.gmra.mxu0 %v523
  %v600 = vpop.f32.mrf.mxu0
  %v601 = vadd.f32 %v504, %v600
  %v602 = vpop.f32.mrf.mxu0
  %603 = vmatprep.mubr.f32.mxu0 0.0
  %604 = vmatmul.mubr.f32.gmra.mxu0 %v526
  %v605 = vpop.f32.mrf.mxu0
  %v606 = vadd.f32 %v509, %v605
  %v607 = vpop.f32.mrf.mxu0
  %608 = vmatprep.mubr.f32.mxu0 0.0
  %609 = vmatmul.mubr.f32.gmra.mxu0 %v529
  %v610 = vpop.f32.mrf.mxu0
  %v611 = vadd.f32 %v514, %v610
  %v612 = vpop.f32.mrf.mxu0
  %613 = vmatprep.mubr.f32.mxu0 0.0
  %614 = vmatmul.mubr.f32.gmra.mxu0 %v532
  %v615 = vpop.f32.mrf.mxu0
  %v616 = vadd.f32 %v519, %v615
  %v617 = vpop.f32.mrf.mxu0
  %618 = vdwg.mxu0
  %v620 = vsel %vm38, %v387, 0
  %v623 = vsel %vm38, %v392, 0
  %v626 = vsel %vm38, %v397, 0
  %v629 = vsel %vm38, %v402, 0
  %631 = vmatprep.subr.mxu0 0.0
  %632 = vmatpush1.xpose.msra.mxu0 0.0
  %633 = vmatprep.subr.mxu0 0.0
  %634 = vmatpush1.xpose.msra.mxu0 0.0
  %635 = vmatprep.subr.mxu0 0.0
  %636 = vmatpush1.xpose.msra.mxu0 0.0
  %637 = vmatprep.subr.mxu0 0.0
  %638 = vmatpush1.xpose.msra.mxu0 0.0
  %639 = vmatprep.subr.mxu0 0.0
  %640 = vmatpush1.xpose.msra.mxu0 0.0
  %641 = vmatprep.subr.mxu0 0.0
  %642 = vmatpush1.xpose.msra.mxu0 0.0
  %643 = vmatprep.subr.mxu0 0.0
  %644 = vmatpush1.xpose.msra.mxu0 0.0
  %645 = vmatprep.subr.mxu0 0.0
  %646 = vmatpush1.xpose.msra.mxu0 0.0
  %647 = vmatprep.subr.mxu0 0.0
  %648 = vmatpush1.xpose.msra.mxu0 0.0
  %649 = vmatprep.subr.mxu0 0.0
  %650 = vmatpush1.xpose.msra.mxu0 0.0
  %651 = vmatprep.subr.mxu0 0.0
  %652 = vmatpush1.xpose.msra.mxu0 0.0
  %653 = vmatprep.subr.mxu0 0.0
  %654 = vmatpush1.xpose.msra.mxu0 0.0
  %655 = vmatprep.subr.mxu0 0.0
  %656 = vmatpush1.xpose.msra.mxu0 %v266
  %657 = vmatprep.subr.mxu0 0.0
  %658 = vmatpush1.xpose.msra.mxu0 %v263
  %659 = vmatprep.subr.mxu0 0.0
  %660 = vmatpush1.xpose.msra.mxu0 %v260
  %661 = vmatprep.subr.mxu0 0.0
  %662 = vmatpush1.xpose.msra.mxu0 %v257
  %663 = vmatprep.subr.mxu0 0.0
  %664 = vmatpush2.xpose.msra.mxu0 0.0
  %665 = vmatprep.subr.mxu0 0.0
  %666 = vmatpush2.xpose.msra.mxu0 0.0
  %667 = vmatprep.subr.mxu0 0.0
  %668 = vmatpush2.xpose.msra.mxu0 0.0
  %669 = vmatprep.subr.mxu0 0.0
  %670 = vmatpush2.xpose.msra.mxu0 0.0
  %671 = vmatprep.subr.mxu0 0.0
  %672 = vmatpush2.xpose.msra.mxu0 0.0
  %673 = vmatprep.subr.mxu0 0.0
  %674 = vmatpush2.xpose.msra.mxu0 0.0
  %675 = vmatprep.subr.mxu0 0.0
  %676 = vmatpush2.xpose.msra.mxu0 0.0
  %677 = vmatprep.subr.mxu0 0.0
  %678 = vmatpush2.xpose.msra.mxu0 0.0
  %679 = vmatprep.subr.mxu0 0.0
  %680 = vmatpush2.xpose.msra.mxu0 0.0
  %681 = vmatprep.subr.mxu0 0.0
  %682 = vmatpush2.xpose.msra.mxu0 0.0
  %683 = vmatprep.subr.mxu0 0.0
  %684 = vmatpush2.xpose.msra.mxu0 0.0
  %685 = vmatprep.subr.mxu0 0.0
  %686 = vmatpush2.xpose.msra.mxu0 0.0
  %687 = vmatprep.subr.mxu0 0.0
  %688 = vmatpush2.xpose.msra.mxu0 0.0
  %689 = vmatprep.subr.mxu0 0.0
  %690 = vmatpush2.xpose.msra.mxu0 0.0
  %691 = vmatprep.subr.mxu0 0.0
  %692 = vmatpush2.xpose.msra.mxu0 0.0
  %693 = vmatprep.subr.mxu0 0.0
  %694 = vmatpush2.xpose.msra.mxu0 0.0
  %695 = vmatprep.mubr.f32.mxu0 0.0
  %696 = vmatmul.mubr.f32.gmra.mxu0 %v620
  %v697 = vpop.f32.mrf.mxu0
  %v698 = vadd.f32 0.0, %v697
  %v699 = vpop.f32.mrf.mxu0
  %700 = vmatprep.mubr.f32.mxu0 0.0
  %701 = vmatmul.mubr.f32.gmra.mxu0 %v623
  %v702 = vpop.f32.mrf.mxu0
  %v703 = vadd.f32 0.0, %v702
  %v704 = vpop.f32.mrf.mxu0
  %705 = vmatprep.mubr.f32.mxu0 0.0
  %706 = vmatmul.mubr.f32.gmra.mxu0 %v626
  %v707 = vpop.f32.mrf.mxu0
  %v708 = vadd.f32 0.0, %v707
  %v709 = vpop.f32.mrf.mxu0
  %710 = vmatprep.mubr.f32.mxu0 0.0
  %711 = vmatmul.mubr.f32.gmra.mxu0 %v629
  %v712 = vpop.f32.mrf.mxu0
  %v713 = vadd.f32 0.0, %v712
  %v714 = vpop.f32.mrf.mxu0
  %715 = vdwg.mxu0
  %v716 = vadd.f32 %v601, %v698
  %v717 = vadd.f32 %v606, %v703
  %v718 = vadd.f32 %v611, %v708
  %v719 = vadd.f32 %v616, %v713
  %v721 = vsel %vm38, %v407, 0
  %v724 = vsel %vm38, %v412, 0
  %v727 = vsel %vm38, %v417, 0
  %v730 = vsel %vm38, %v422, 0
  %732 = vmatprep.subr.mxu0 0.0
  %733 = vmatpush1.xpose.msra.mxu0 0.0
  %734 = vmatprep.subr.mxu0 0.0
  %735 = vmatpush1.xpose.msra.mxu0 0.0
  %736 = vmatprep.subr.mxu0 0.0
  %737 = vmatpush1.xpose.msra.mxu0 0.0
  %738 = vmatprep.subr.mxu0 0.0
  %739 = vmatpush1.xpose.msra.mxu0 0.0
  %740 = vmatprep.subr.mxu0 0.0
  %741 = vmatpush1.xpose.msra.mxu0 0.0
  %742 = vmatprep.subr.mxu0 0.0
  %743 = vmatpush1.xpose.msra.mxu0 0.0
  %744 = vmatprep.subr.mxu0 0.0
  %745 = vmatpush1.xpose.msra.mxu0 0.0
  %746 = vmatprep.subr.mxu0 0.0
  %747 = vmatpush1.xpose.msra.mxu0 0.0
  %748 = vmatprep.subr.mxu0 0.0
  %749 = vmatpush1.xpose.msra.mxu0 0.0
  %750 = vmatprep.subr.mxu0 0.0
  %751 = vmatpush1.xpose.msra.mxu0 0.0
  %752 = vmatprep.subr.mxu0 0.0
  %753 = vmatpush1.xpose.msra.mxu0 0.0
  %754 = vmatprep.subr.mxu0 0.0
  %755 = vmatpush1.xpose.msra.mxu0 0.0
  %756 = vmatprep.subr.mxu0 0.0
  %757 = vmatpush1.xpose.msra.mxu0 %v278
  %758 = vmatprep.subr.mxu0 0.0
  %759 = vmatpush1.xpose.msra.mxu0 %v275
  %760 = vmatprep.subr.mxu0 0.0
  %761 = vmatpush1.xpose.msra.mxu0 %v272
  %762 = vmatprep.subr.mxu0 0.0
  %763 = vmatpush1.xpose.msra.mxu0 %v269
  %764 = vmatprep.subr.mxu0 0.0
  %765 = vmatpush2.xpose.msra.mxu0 0.0
  %766 = vmatprep.subr.mxu0 0.0
  %767 = vmatpush2.xpose.msra.mxu0 0.0
  %768 = vmatprep.subr.mxu0 0.0
  %769 = vmatpush2.xpose.msra.mxu0 0.0
  %770 = vmatprep.subr.mxu0 0.0
  %771 = vmatpush2.xpose.msra.mxu0 0.0
  %772 = vmatprep.subr.mxu0 0.0
  %773 = vmatpush2.xpose.msra.mxu0 0.0
  %774 = vmatprep.subr.mxu0 0.0
  %775 = vmatpush2.xpose.msra.mxu0 0.0
  %776 = vmatprep.subr.mxu0 0.0
  %777 = vmatpush2.xpose.msra.mxu0 0.0
  %778 = vmatprep.subr.mxu0 0.0
  %779 = vmatpush2.xpose.msra.mxu0 0.0
  %780 = vmatprep.subr.mxu0 0.0
  %781 = vmatpush2.xpose.msra.mxu0 0.0
  %782 = vmatprep.subr.mxu0 0.0
  %783 = vmatpush2.xpose.msra.mxu0 0.0
  %784 = vmatprep.subr.mxu0 0.0
  %785 = vmatpush2.xpose.msra.mxu0 0.0
  %786 = vmatprep.subr.mxu0 0.0
  %787 = vmatpush2.xpose.msra.mxu0 0.0
  %788 = vmatprep.subr.mxu0 0.0
  %789 = vmatpush2.xpose.msra.mxu0 0.0
  %790 = vmatprep.subr.mxu0 0.0
  %791 = vmatpush2.xpose.msra.mxu0 0.0
  %792 = vmatprep.subr.mxu0 0.0
  %793 = vmatpush2.xpose.msra.mxu0 0.0
  %794 = vmatprep.subr.mxu0 0.0
  %795 = vmatpush2.xpose.msra.mxu0 0.0
  %796 = vmatprep.mubr.f32.mxu0 0.0
  %797 = vmatmul.mubr.f32.gmra.mxu0 %v721
  %v798 = vpop.f32.mrf.mxu0
  %v799 = vadd.f32 0.0, %v798
  %v800 = vpop.f32.mrf.mxu0
  %801 = vmatprep.mubr.f32.mxu0 0.0
  %802 = vmatmul.mubr.f32.gmra.mxu0 %v724
  %v803 = vpop.f32.mrf.mxu0
  %v804 = vadd.f32 0.0, %v803
  %v805 = vpop.f32.mrf.mxu0
  %806 = vmatprep.mubr.f32.mxu0 0.0
  %807 = vmatmul.mubr.f32.gmra.mxu0 %v727
  %v808 = vpop.f32.mrf.mxu0
  %v809 = vadd.f32 0.0, %v808
  %v810 = vpop.f32.mrf.mxu0
  %811 = vmatprep.mubr.f32.mxu0 0.0
  %812 = vmatmul.mubr.f32.gmra.mxu0 %v730
  %v813 = vpop.f32.mrf.mxu0
  %v814 = vadd.f32 0.0, %v813
  %v815 = vpop.f32.mrf.mxu0
  %816 = vdwg.mxu0
  %v817 = vadd.f32 %v716, %v799
  %v818 = vadd.f32 %v717, %v804
  %v819 = vadd.f32 %v718, %v809
  %v820 = vadd.f32 %v719, %v814
  %821 = vst.msk [vmem:[%s3] sm:$0xff] %vm38, %v817
  %822 = vst.msk [vmem:[%s3 + $0x8] sm:$0xff] %vm38, %v818
  %823 = vst.msk [vmem:[%s3 + $0x10] sm:$0xff] %vm38, %v819
  %824 = vst.msk [vmem:[%s3 + $0x18] sm:$0xff] %vm38, %v820
  // Predicated region
  $region14: #{one_way_locc_forward.1} parent=0 // pred_check
    _
  $region15: #{one_way_locc_forward.1} parent=0 // pred_check_branch
    %826 = sbr.rel (0) target = $region17
  $region16: #{one_way_locc_forward.1} parent=0 // pred_region
    _
  $region17: #{one_way_locc_forward.1} parent=0 // pred_fallthru
    _
  // Predicated region
  $region18: #{one_way_locc_forward.1} parent=0 // pred_check
    _
  $region19: #{one_way_locc_forward.1} parent=0 // pred_check_branch
    %828 = sbr.rel (0) target = $region21
  $region20: #{one_way_locc_forward.1} parent=0 // pred_region
    _
  $region21: #{one_way_locc_forward.1} parent=0 // pred_fallthru
    _

</llo_original>
